<compile_context>
chip_gen: v7x
topology: tpu7x:2x2x1
jax: 0.10.0
libtpu: 0.0.40
codegen_flags: <defaults>
</compile_context>

<pallas_src>
import functools

import jax
import jax.numpy as jnp
from jax.experimental import pallas as pl
from jax.experimental.pallas import tpu as pltpu


_VMEM_LIMIT = 32 * 1024 * 1024          # safe scoped-VMEM limit on v5e/v6e/v7x
_TARGET_BLOCK_BYTES = 2 * 1024 * 1024   # 2x(in)+2x(out) double-buffers << VMEM


def _pick_row_tile(seq_len: int, n_cols: int, itemsize: int) -> int:
    """Row tile: multiple of 8 sublanes, ~2 MiB per block, or the full seq."""
    if seq_len <= 8:
        return seq_len
    rows = _TARGET_BLOCK_BYTES // max(1, n_cols * itemsize)
    rows = min(rows, seq_len)
    rows = max(8, (rows // 8) * 8)
    return seq_len if rows >= seq_len else rows


def _tiled_row_kernel(x_ref, o_ref, *, copy_len, tile_rows, n_tiles, need_pad):
    """One (tile_rows, C) output tile per grid step.

    Static tile classification (no per-element work except at the boundary):
      i <  n_full        : fully inside the copy region -> single unmasked store
      i == n_full        : boundary tile -> select(copy rows, zeros), one store
      i >= n_bound_end   : fully in the pad region -> single zero store
    When need_pad is False the whole kernel is one store.
    """
    if not need_pad:
        o_ref[...] = x_ref[...]
        return

    i = pl.program_id(0)
    n_full = copy_len // tile_rows                      # fully-copy tiles
    n_bound_end = -(-copy_len // tile_rows)             # == cdiv(copy_len, tile_rows)

    if n_full > 0:
        @pl.when(i < n_full)
        def _copy():
            o_ref[...] = x_ref[...]

    if n_bound_end > n_full:  # exactly one boundary tile exists
        @pl.when(i == n_full)
        def _copy_and_pad():
            xv = x_ref[...]
            rows = (jax.lax.broadcasted_iota(jnp.int32, o_ref.shape, 0)
                    + i * tile_rows)
            o_ref[...] = jnp.where(rows < copy_len, xv, jnp.zeros_like(xv))

    if n_tiles > n_bound_end:  # pure-pad tiles: zero store only
        @pl.when(i >= n_bound_end)
        def _pad_only():
            o_ref[...] = jnp.zeros_like(o_ref)


def _simple_row_kernel(x_ref, o_ref, *, copy_len, pad_len):
    # Single-block fallback for small / awkwardly-shaped padded inputs:
    # copy the rows we have, zero only the tail.
    o_ref[pl.ds(0, copy_len), :] = x_ref[...]
    if pad_len > 0:
        o_ref[pl.ds(copy_len, pad_len), :] = jnp.zeros(
            (pad_len, o_ref.shape[1]), o_ref.dtype)


def _lane_kernel(x_ref, o_ref, *, copy_len, pad_len):
    # 1-D inputs: sequence lives on the lane axis (lane-dense stores).
    o_ref[:, pl.ds(0, copy_len)] = x_ref[...]
    if pad_len > 0:
        o_ref[:, pl.ds(copy_len, pad_len)] = jnp.zeros(
            (o_ref.shape[0], pad_len), o_ref.dtype)


def my_crop(x, seq_len: int):
    """Pallas equivalent of MyCrop(seq_len).forward(x)."""
    unsqueezed = x.ndim == 1
    if not unsqueezed:
        assert x.ndim == 2

    L = x.shape[0]
    if L > seq_len:
        start_idx = int(L / 2 - seq_len / 2)  # matches PyTorch int() midpoint math
        copy_len = seq_len
    else:
        start_idx = 0
        copy_len = L
    pad_len = seq_len - copy_len

    if unsqueezed:
        # Lane-dense layout: (L,) -> (1, N) so stores use all 128 lanes instead
        # of an (L, 1) column layout that wastes 127/128 of the lane bandwidth.
        x_win = x[start_idx:start_idx + copy_len] if L > seq_len else x
        x_in = x_win[None, :]
        out = pl.pallas_call(
            functools.partial(_lane_kernel, copy_len=copy_len, pad_len=pad_len),
            out_shape=jax.ShapeDtypeStruct((1, seq_len), x.dtype),
            in_specs=[pl.BlockSpec((1, copy_len), lambda: (0, 0))],
            out_specs=pl.BlockSpec((1, seq_len), lambda: (0, 0)),
            compiler_params=pltpu.CompilerParams(vmem_limit_bytes=_VMEM_LIMIT),
        )(x_in)
        return out[0]

    C = x.shape[1]
    itemsize = jnp.dtype(x.dtype).itemsize
    tile_rows = _pick_row_tile(seq_len, C, itemsize)
    use_tiled = (tile_rows % 8 == 0) or (copy_len == seq_len)

    if not use_tiled:
        # Small pad-only case whose row count can't satisfy the (8,128) tiling
        # rule for both input and output: single block, copy + zero tail only.
        out = pl.pallas_call(
            functools.partial(_simple_row_kernel,
                              copy_len=copy_len, pad_len=pad_len),
            out_shape=jax.ShapeDtypeStruct((seq_len, C), x.dtype),
            in_specs=[pl.BlockSpec((copy_len, C), lambda: (0, 0))],
            out_specs=pl.BlockSpec((seq_len, C), lambda: (0, 0)),
            compiler_params=pltpu.CompilerParams(vmem_limit_bytes=_VMEM_LIMIT),
        )(x)
        return out

    n_tiles = pl.cdiv(seq_len, tile_rows)

    # Fetch only the cropped window from HBM.  If the crop start is aligned to
    # the row tile, bake the offset straight into the input index_map (zero
    # extra HBM traffic); otherwise pre-slice once in the wrapper.
    if L > seq_len and tile_rows % 8 == 0 and start_idx % tile_rows == 0:
        x_in = x
        block_off = start_idx // tile_rows
        last_rel_block = n_tiles - 1
    else:
        x_in = x[start_idx:start_idx + copy_len] if L > seq_len else x
        block_off = 0
        last_rel_block = max(pl.cdiv(copy_len, tile_rows) - 1, 0)

    def in_index_map(i):
        # Clamp so pad-only tiles never request an out-of-range input block.
        return (jnp.minimum(i, last_rel_block) + block_off, 0)

    out = pl.pallas_call(
        functools.partial(_tiled_row_kernel, copy_len=copy_len,
                          tile_rows=tile_rows, n_tiles=int(n_tiles),
                          need_pad=pad_len > 0),
        out_shape=jax.ShapeDtypeStruct((seq_len, C), x.dtype),
        grid=(n_tiles,),
        in_specs=[pl.BlockSpec((tile_rows, C), in_index_map)],
        out_specs=pl.BlockSpec((tile_rows, C), lambda i: (i, 0)),
        compiler_params=pltpu.CompilerParams(
            dimension_semantics=("parallel",),
            vmem_limit_bytes=_VMEM_LIMIT),
    )(x_in)
    return out


def _reference(x, seq_len: int):
    # Pure-JAX reference mirroring the PyTorch semantics.
    unsqueezed = False
    if x.ndim == 1:
        unsqueezed = True
        x = x[:, None]
    L = x.shape[0]
    if L > seq_len:
        s = int(L / 2 - seq_len / 2)
        x = x[s:s + seq_len, :]
    if x.shape[0] < seq_len:
        x = jnp.pad(x, ((0, seq_len - x.shape[0]), (0, 0)))
    if unsqueezed:
        x = x[:, 0]
    return x


if __name__ == "__main__":
    key = jax.random.PRNGKey(0)
    k1, k2, k3, k4, k5 = jax.random.split(key, 5)
    seq_len = 8

    # crop case, unaligned start -> wrapper pre-slice path
    x_long = jax.random.normal(k1, (16, 4), dtype=jnp.float32)
    # crop case, tile-aligned start -> offset baked into the input index_map
    x_long_aligned = jax.random.normal(k2, (24, 4), dtype=jnp.float32)
    # pad case, 1-D input -> lane-dense path
    x_short_1d = jax.random.normal(k3, (5,), dtype=jnp.float32)
    # pad case, 2-D input -> tiled masked-boundary path
    x_short_2d = jax.random.normal(k4, (5, 4), dtype=jnp.float32)
    # passthrough case: exactly seq_len rows
    x_equal = jax.random.normal(k5, (8, 4), dtype=jnp.float32)

    ok = True
    for x in (x_long, x_long_aligned, x_short_1d, x_short_2d, x_equal):
        y = jax.block_until_ready(my_crop(x, seq_len))
        y_ref = _reference(x, seq_len)
        ok &= bool(jnp.allclose(y, y_ref))
        ok &= (y.shape == y_ref.shape)

    if ok:
        print("KERNEL_OK")
    else:
        print("MISMATCH")
</pallas_src>

<mosaic_0001>
module attributes {stable_mosaic.version = 11 : i64} {
  func.func @_tiled_row_kernel(%arg0: i32, %arg1: memref<8x4xf32, #tpu.memory_space<vmem>>, %arg2: memref<8x4xf32, #tpu.memory_space<vmem>>) attributes {dimension_semantics = [#tpu.dimension_semantics<parallel>], iteration_bounds = array<i64: 1>, scalar_prefetch = 0 : i64, scratch_operands = 0 : i64, tpu.core_type = #tpu.core_type<tc>, window_params = [{transform_indices = @transform_0, window_bounds = array<i64: 8, 4>}, {transform_indices = @transform_1, window_bounds = array<i64: 8, 4>}]} {
    %c0 = arith.constant 0 : index
    %c0_0 = arith.constant 0 : index
    %0 = vector.load %arg1[%c0, %c0_0] : memref<8x4xf32, #tpu.memory_space<vmem>>, vector<8x4xf32>
    %c0_1 = arith.constant 0 : index
    %c0_2 = arith.constant 0 : index
    %1 = vector.load %arg2[%c0_1, %c0_2] : memref<8x4xf32, #tpu.memory_space<vmem>>, vector<8x4xf32>
    tpu.vector_store %arg2[%c0_1, %c0_2], %0 {strides = array<i32>} : memref<8x4xf32, #tpu.memory_space<vmem>>, vector<8x4xf32>,
    return
  }
  func.func @transform_0(%arg0: i32) -> (i32, i32) {
    %c0_i32 = arith.constant 0 : i32
    %0 = arith.minsi %arg0, %c0_i32 : i32
    %c0_i32_0 = arith.constant 0 : i32
    %1 = arith.addi %0, %c0_i32_0 : i32
    %c0_i32_1 = arith.constant 0 : i32
    %c0_i32_2 = arith.constant 0 : i32
    return %1, %c0_i32_1 : i32, i32
  }
  func.func @transform_1(%arg0: i32) -> (i32, i32) {
    %c0_i32 = arith.constant 0 : i32
    %c0_i32_0 = arith.constant 0 : i32
    return %arg0, %c0_i32 : i32, i32
  }
}

</mosaic_0001>

<llo_original>
// kernel: tpu_custom_call.1
$region0: #{tpu_custom_call.1}
  #allocation0 [shape = 'u32[]', space=smem, size = 0x4, offset = 0x4, fixed_abs, tag = 'smem constant byte address 0x4 - core index']
  #allocation1 [shape = 'u32[144,128]{1,0:T(1,128)}', space=vmem, size = 0x12000, scoped, tag = 'internal scratch']
  %s0 = inlined_call_operand.vmem [shape: f32[8,4], index: 0, kind: input, shape index: {}]
  %s1 = inlined_call_operand.vmem [shape: f32[8,4], index: 1, kind: output, shape index: {}]
  %s2 = sld [smem:[#allocation0]]
  $region14: #{tpu_custom_call.1} parent=0
    _
  %s4 = ssub.s32 1, %s2
  %s5 = scalar_select 0, %s4, %s2
  // Predicated region
  $region2: #{tpu_custom_call.1} parent=0 // pred_check
    _
  $region3: #{tpu_custom_call.1} parent=0 // pred_check_branch
    %7 = sbr.rel (0) target = $region5
  $region4: #{tpu_custom_call.1} parent=0 // pred_region
    _
  $region5: #{tpu_custom_call.1} parent=0 // pred_fallthru
    _
  %v8 = vld [vmem:[%s0] sm:$0xff]
  %vm9 = vcmask 31744
  %10 = vst.msk [vmem:[%s1] sm:$0xff] %vm9, %v8
  // Predicated region
  $region6: #{tpu_custom_call.1} parent=0 // pred_check
    _
  $region7: #{tpu_custom_call.1} parent=0 // pred_check_branch
    %12 = sbr.rel (0) target = $region9
  $region8: #{tpu_custom_call.1} parent=0 // pred_region
    _
  $region9: #{tpu_custom_call.1} parent=0 // pred_fallthru
    _
  // Predicated region
  $region10: #{tpu_custom_call.1} parent=0 // pred_check
    _
  $region11: #{tpu_custom_call.1} parent=0 // pred_check_branch
    %14 = sbr.rel (0) target = $region13
  $region12: #{tpu_custom_call.1} parent=0 // pred_region
    _
  $region13: #{tpu_custom_call.1} parent=0 // pred_fallthru
    _

</llo_original>
